<compile_context>
chip_gen: v7x
topology: tpu7x:2x2x1
jax: 0.10.0
libtpu: 0.0.40
codegen_flags: <defaults>
</compile_context>

<pallas_src>
import functools

import jax
import jax.numpy as jnp
from jax.experimental import pallas as pl
from jax.experimental.pallas import tpu as pltpu


def _label_smoothing_kernel(tgt_ref, pred_ref, out_ref, *,
                            confidence, smooth_val, n_rows, n_cols,
                            row_tile, col_tile,
                            mask_rows, mask_cols, add_col_offset):
    """One grid step: reduce a (row_tile, col_tile) slab of `pred`.

    tgt_ref : (row_tile, 1) int32  per-row-tile targets (reused across j)
    pred_ref: (row_tile, col_tile) predictions tile (f32 or bf16)
    out_ref : (1, 1, 8, 128) f32   lane-dense partial-result slab
    """
    pred = pred_ref[...].astype(jnp.float32)           # upcast in-register
    tgt = tgt_ref[...]                                  # (row_tile, 1) int32

    col = jax.lax.broadcasted_iota(jnp.int32, pred.shape, 1)
    if add_col_offset:                                  # only when class-chunked
        col = col + pl.program_id(1) * col_tile

    # weight[r, c] = confidence if c == tgt[r] else smooth_val
    weight = jnp.where(col == tgt, confidence, smooth_val)
    contrib = weight * pred
    if mask_cols:
        # Last class chunk may read past C; keep this a select so NaN/Inf
        # garbage in the boundary block cannot poison the sum.
        contrib = jnp.where(col < n_cols, contrib, 0.0)

    row_sum = jnp.sum(contrib, axis=-1, keepdims=True)  # (row_tile, 1)
    if mask_rows:
        # Tail-row mask applied to the per-row sums (select, not multiply).
        row_idx = (pl.program_id(0) * row_tile
                   + jax.lax.broadcasted_iota(jnp.int32, (row_tile, 1), 0))
        row_sum = jnp.where(row_idx < n_rows, row_sum, 0.0)

    block_loss = -jnp.sum(row_sum)
    # Unmasked lane-dense store; host reads element [..., 0, 0] of each slab.
    out_ref[...] = jnp.full(out_ref.shape, block_loss, dtype=jnp.float32)


def label_smoothing_loss(pred, target, smoothing=0.1, *,
                         tile_bytes=4 * 1024 * 1024):
    """pred: (N, C) float32/bfloat16 log-probs, target: (N,) int -> scalar f32."""
    N, C = pred.shape
    elem = jnp.dtype(pred.dtype).itemsize
    confidence = 1.0 - float(smoothing)
    smooth_val = float(smoothing) / (C - 1)

    # ---- tile selection ---------------------------------------------------
    rows_budget = tile_bytes // (C * elem)          # rows of pred per tile
    if rows_budget >= 16:
        col_tile = C
        row_tile = min(rows_budget, 8192)           # cap bounds target block too
        if row_tile >= N:
            row_tile = N                            # full-dim block is legal
        else:
            row_tile = max(16, (row_tile // 16) * 16)          # bf16-safe packing
            row_tile = min(row_tile, max(16, (N // 16) * 16))  # blocks start < N
    else:
        # Huge-C: chunk the class dim so a tile still fits the budget.
        row_tile = min(16, N)
        col_tile = max(128, (tile_bytes // (max(row_tile, 1) * elem)) // 128 * 128)
        if col_tile >= C:
            col_tile = C

    num_row_tiles = pl.cdiv(N, row_tile)
    num_col_tiles = pl.cdiv(C, col_tile)
    n_pad = num_row_tiles * row_tile

    mask_rows = (N % row_tile) != 0
    mask_cols = (C % col_tile) != 0

    tgt2d = target.astype(jnp.int32).reshape(N, 1)
    if n_pad != N:
        tgt2d = jnp.pad(tgt2d, ((0, n_pad - N), (0, 0)))

    # Explicit VMEM budget: double-buffered pred tile + lane-padded (int32)
    # target block + output slabs, plus 50% headroom. Always << 32 MiB.
    vmem_bytes = (2 * row_tile * col_tile * elem
                  + 2 * row_tile * 128 * 4
                  + 2 * 8 * 128 * 4)
    vmem_limit = int(min(48 * 1024 * 1024,
                         max(8 * 1024 * 1024, vmem_bytes * 3 // 2)))

    kernel = functools.partial(
        _label_smoothing_kernel,
        confidence=confidence, smooth_val=smooth_val,
        n_rows=N, n_cols=C, row_tile=row_tile, col_tile=col_tile,
        mask_rows=mask_rows, mask_cols=mask_cols,
        add_col_offset=(num_col_tiles > 1))

    partials = pl.pallas_call(
        kernel,
        out_shape=jax.ShapeDtypeStruct(
            (num_row_tiles, num_col_tiles, 8, 128), jnp.float32),
        grid_spec=pltpu.PrefetchScalarGridSpec(
            num_scalar_prefetch=0,
            grid=(num_row_tiles, num_col_tiles),
            in_specs=[
                # target: per-row-tile block (index ignores j -> no re-DMA
                # while the class-chunk axis iterates)
                pl.BlockSpec((row_tile, 1), lambda i, j: (i, 0)),
                # pred: one streaming tile per grid step
                pl.BlockSpec((row_tile, col_tile), lambda i, j: (i, j)),
            ],
            out_specs=pl.BlockSpec((1, 1, 8, 128), lambda i, j: (i, j, 0, 0)),
        ),
        compiler_params=pltpu.CompilerParams(
            # Independent per-tile outputs -> fully parallel grid (v7x megacore
            # keeps each TC's VPU work halved; kernel stays DMA-bound).
            dimension_semantics=("parallel", "parallel"),
            vmem_limit_bytes=vmem_limit,
        ),
    )(tgt2d, pred)

    # Tiny final reduction + mean over true rows in plain JAX.
    return jnp.sum(partials[:, :, 0, 0]) / jnp.float32(N)


def _reference(pred, target, smoothing):
    """Pure-JAX reference mirroring the PyTorch forward."""
    N, C = pred.shape
    confidence = 1.0 - smoothing
    true_dist = jnp.full((N, C), smoothing / (C - 1), dtype=jnp.float32)
    true_dist = true_dist.at[jnp.arange(N), target].set(confidence)
    return jnp.mean(jnp.sum(-true_dist * pred.astype(jnp.float32), axis=-1))


if __name__ == "__main__":
    key = jax.random.PRNGKey(0)
    smoothing = 0.1

    # Small deterministic cases:
    #   0) single-tile f32 path
    #   1) multi-row-tile f32 path with a ragged row tail (masked in-kernel)
    #   2) bf16 input with in-kernel upcast + class-chunked grid + both masks
    cases = [
        (16, 128, jnp.float32, 4 * 1024 * 1024),
        (100, 128, jnp.float32, 32 * 1024),
        (24, 384, jnp.bfloat16, 8 * 1024),
    ]

    for idx, (N, C, dtype, tb) in enumerate(cases):
        key, k1, k2 = jax.random.split(key, 3)
        logits = jax.random.normal(k1, (N, C), dtype=jnp.float32)
        pred = jax.nn.log_softmax(logits, axis=-1).astype(dtype)
        target = jax.random.randint(k2, (N,), 0, C, dtype=jnp.int32)

        loss = label_smoothing_loss(pred, target, smoothing, tile_bytes=tb)
        loss = jax.block_until_ready(loss)

        ref = _reference(pred, target, smoothing)
        assert jnp.allclose(loss, ref, atol=1e-5, rtol=1e-5), (idx, loss, ref)

    print("KERNEL_OK")
</pallas_src>

<mosaic_0001>
module attributes {stable_mosaic.version = 11 : i64} {
  func.func @_label_smoothing_kernel(%arg0: i32, %arg1: i32, %arg2: memref<16x1xi32, #tpu.memory_space<vmem>>, %arg3: memref<16x128xf32, #tpu.memory_space<vmem>>, %arg4: memref<1x1x8x128xf32, #tpu.memory_space<vmem>>) attributes {dimension_semantics = [#tpu.dimension_semantics<parallel>, #tpu.dimension_semantics<parallel>], iteration_bounds = array<i64: 1, 1>, scalar_prefetch = 0 : i64, scratch_operands = 0 : i64, tpu.core_type = #tpu.core_type<tc>, window_params = [{transform_indices = @transform_0, window_bounds = array<i64: 16, 1>}, {transform_indices = @transform_1, window_bounds = array<i64: 16, 128>}, {transform_indices = @transform_2, window_bounds = array<i64: 1, 1, 8, 128>}]} {
    %c0 = arith.constant 0 : index
    %c0_0 = arith.constant 0 : index
    %0 = vector.load %arg3[%c0, %c0_0] : memref<16x128xf32, #tpu.memory_space<vmem>>, vector<16x128xf32>
    %c0_1 = arith.constant 0 : index
    %c0_2 = arith.constant 0 : index
    %1 = vector.load %arg2[%c0_1, %c0_2] : memref<16x1xi32, #tpu.memory_space<vmem>>, vector<16x1xi32>
    %2 = tpu.iota {dimensions = array<i32: 1>} : vector<16x128xi32>
    %3 = vector.broadcast %1 : vector<16x1xi32> to vector<16x128xi32>
    %4 = arith.cmpi eq, %2, %3 : vector<16x128xi32>
    %cst = arith.constant 0.899999976 : f32
    %cst_3 = arith.constant 7.87401571E-4 : f32
    %5 = vector.broadcast %cst : f32 to vector<16x128xf32>
    %6 = vector.broadcast %cst_3 : f32 to vector<16x128xf32>
    %7 = arith.select %4, %5, %6 : vector<16x128xi1>, vector<16x128xf32>
    %8 = arith.mulf %7, %0 : vector<16x128xf32>
    %cst_4 = arith.constant dense<0.000000e+00> : vector<16xf32>
    %9 = vector.multi_reduction <add>, %8, %cst_4 [1] : vector<16x128xf32> to vector<16xf32>
    %10 = vector.shape_cast %9 : vector<16xf32> to vector<16x1xf32>
    %11 = vector.shape_cast %10 : vector<16x1xf32> to vector<1x16x1xf32>
    %cst_5 = arith.constant dense<0.000000e+00> : vector<1xf32>
    %12 = vector.multi_reduction <add>, %11, %cst_5 [1, 2] : vector<1x16x1xf32> to vector<1xf32>
    %13 = vector.shape_cast %12 : vector<1xf32> to vector<1x1x1xf32>
    %14 = vector.extract %13[0, 0, 0] : f32 from vector<1x1x1xf32>
    %cst_6 = arith.constant 0.000000e+00 : f32
    %15 = arith.subf %cst_6, %14 : f32
    %16 = vector.broadcast %15 : f32 to vector<1x1x8x128xf32>
    %c0_7 = arith.constant 0 : index
    %c0_8 = arith.constant 0 : index
    %c0_9 = arith.constant 0 : index
    %c0_10 = arith.constant 0 : index
    %17 = vector.load %arg4[%c0_7, %c0_8, %c0_9, %c0_10] : memref<1x1x8x128xf32, #tpu.memory_space<vmem>>, vector<1x1x8x128xf32>
    tpu.vector_store %arg4[%c0_7, %c0_8, %c0_9, %c0_10], %16 {strides = array<i32>} : memref<1x1x8x128xf32, #tpu.memory_space<vmem>>, vector<1x1x8x128xf32>,
    return
  }
  func.func @transform_0(%arg0: i32, %arg1: i32) -> (i32, i32) {
    %c0_i32 = arith.constant 0 : i32
    %c0_i32_0 = arith.constant 0 : i32
    return %arg0, %c0_i32 : i32, i32
  }
  func.func @transform_1(%arg0: i32, %arg1: i32) -> (i32, i32) {
    %c0_i32 = arith.constant 0 : i32
    return %arg0, %arg1 : i32, i32
  }
  func.func @transform_2(%arg0: i32, %arg1: i32) -> (i32, i32, i32, i32) {
    %c0_i32 = arith.constant 0 : i32
    %c0_i32_0 = arith.constant 0 : i32
    %c0_i32_1 = arith.constant 0 : i32
    return %arg0, %arg1, %c0_i32, %c0_i32_0 : i32, i32, i32, i32
  }
}

</mosaic_0001>

<llo_original>
// kernel: tpu_custom_call.1
$region0: #{tpu_custom_call.1}
  #allocation0 [shape = 'u32[]', space=smem, size = 0x4, offset = 0x4, fixed_abs, tag = 'smem constant byte address 0x4 - core index']
  #allocation1 [shape = 'u32[144,128]{1,0:T(1,128)}', space=vmem, size = 0x12000, scoped, tag = 'internal scratch']
  %s0 = inlined_call_operand.vmem [shape: s32[16,1], index: 0, kind: input, shape index: {}]
  %s1 = inlined_call_operand.vmem [shape: f32[16,128], index: 1, kind: input, shape index: {}]
  %s2 = inlined_call_operand.hbm [shape: f32[1,1,8,128], index: 2, kind: output, shape index: {}]
  %s3 = sld [smem:[#allocation0]]
  $region18: #{tpu_custom_call.1} parent=0
    _
  %s5 = ssub.s32 1, %s3
  %s6 = scalar_select 0, %s5, %s3
  $region1: #{tpu_custom_call.1} parent=0
    #allocation2 [shape = 'u8[4096]{0}', space=vmem, size = 0x1000, scoped, tag = 'output window, operand 0, single buffered']
    #allocation3 [shape = 's32[1]{0}', space=sflag, size = 0x4, scoped, tag = 'scoped memory for tpu_custom_call.1']
    %7 = vsyncpa [#allocation3], 0
    // Predicated region
    $region2: #{tpu_custom_call.1} parent=1 // pred_check
      _
    $region3: #{tpu_custom_call.1} parent=1 // pred_check_branch
      %9 = sbr.rel (0) target = $region5
    $region4: #{tpu_custom_call.1} parent=1 // pred_region
      _
    $region5: #{tpu_custom_call.1} parent=1 // pred_fallthru
      _
    // Predicated region
    $region6: #{tpu_custom_call.1} parent=1 // pred_check
      _
    $region7: #{tpu_custom_call.1} parent=1 // pred_check_branch
      %11 = sbr.rel (0) target = $region9
    $region8: #{tpu_custom_call.1} parent=1 // pred_region
      _
    $region9: #{tpu_custom_call.1} parent=1 // pred_fallthru
      _
    %v12 = vld [vmem:[%s1] sm:$0xff]
    %v13 = vld [vmem:[%s1 + $0x8] sm:$0xff]
    %v14 = vld [vmem:[%s0] sm:$0xff]
    %v15 = vld [vmem:[%s0 + $0x8] sm:$0xff]
    %v16 = vlaneseq
    %v17 = vand.u32 %v16, 127
    %18 = vset.pattern.permute.xlu0 0
    %19 = vperm.xlu0 %18, %v14
    %v20 = vpop.permute.xlu0 %19
    %21 = vset.pattern.permute.xlu0 0
    %22 = vperm.xlu0 %21, %v15
    %v23 = vpop.permute.xlu0 %22
    %vm24 = vcmp.eq.s32.totalorder %v17, %v20
    %vm25 = vcmp.eq.s32.totalorder %v17, %v23
    %v26 = vsel %vm24, 0.9, 0.0007874016
    %v27 = vsel %vm25, 0.9, 0.0007874016
    %v28 = vmul.f32 %v26, %v12
    %v29 = vmul.f32 %v27, %v13
    %30 = vadd.xlane.f32.xlu0 %v28
    %v31 = vpop.xlane.xlu0 %30
    %32 = vadd.xlane.f32.xlu0 %v29
    %v33 = vpop.xlane.xlu0 %32
    %vm34 = vcmask 7168
    %v35 = vsel %vm34, %v31, 0.0
    %v36 = vsel %vm34, %v33, 0.0
    %v37 = vadd.f32 %v35, %v36
    %38 = vadd.xlane.f32.xlu0 %v37
    %v39 = vpop.xlane.xlu0 %38
    %v40 = vrot.slane %v39, 4
    %v41 = vadd.f32 %v39, %v40
    %v42 = vrot.slane %v41, 2
    %v43 = vadd.f32 %v41, %v42
    %v44 = vrot.slane %v43, 1
    %v45 = vadd.f32 %v43, %v44
    %s46 = vtos %v45
    %s47 = ssub.f32 0.0, %s46
    %v48 = vstv %s47
    %49 = vst [vmem:[#allocation2] sm:$0xff] %v48
    // Predicated region
    $region10: #{tpu_custom_call.1} parent=1 // pred_check
      _
    $region11: #{tpu_custom_call.1} parent=1 // pred_check_branch
      %51 = sbr.rel (0) target = $region13
    $region12: #{tpu_custom_call.1} parent=1 // pred_region
      %s53 = ssub.s32 128, 128
      %54 = vsyncadd [#allocation3], %s53
      %s56 = sshll.u32 [#allocation2], 4
      %s57 = int_to_ptr.vmem [resolvable:$true] %s56
      %59 = dma.vmem_to_hbm [thread:$0]  %s57, 128, %s2, [#allocation3]
    $region13: #{tpu_custom_call.1} parent=1 // pred_fallthru
      _
    // Predicated region
    $region14: #{tpu_custom_call.1} parent=1 // pred_check
      _
    $region15: #{tpu_custom_call.1} parent=1 // pred_check_branch
      %61 = sbr.rel (0) target = $region17
    $region16: #{tpu_custom_call.1} parent=1 // pred_region
      %62 = dma.done [#allocation3], 128
    $region17: #{tpu_custom_call.1} parent=1 // pred_fallthru
      _
    %63 = vsyncpa [#allocation3], 1

</llo_original>
